<compile_context>
chip_gen: v7x
topology: tpu7x:2x2x1
jax: 0.10.0
libtpu: 0.0.40
codegen_flags: <defaults>
</compile_context>

<pallas_src>
import functools
import math

import jax
import jax.numpy as jnp
from jax.experimental import pallas as pl
from jax.experimental.pallas import tpu as pltpu

HOUR_SIZE = 24
DAY_SIZE = 32
MONTH_SIZE = 13
FUSED_ROWS = 48  # 13 month + 32 day + 3 zero-pad (sublane aligned)


def _embed_kernel(x_ref, tbl_ref, out_ref, *, f, fold):
    # x_ref:   (tile_r, fold*f)     fold original rows packed into one packed row
    # tbl_ref: (fold*48, fold*D)    block-diagonal fused month/day table
    # out_ref: (tile_r, fold*D)     lane-dense packed output (fold*D % 128 == 0)
    x = x_ref[...]
    tr = x.shape[0]
    kdim = fold * FUSED_ROWS
    cols = jax.lax.broadcasted_iota(jnp.int32, (tr, kdim), 1)

    hot = None
    for g in range(fold):  # unrolled at trace time (fold <= 16)
        base = g * FUSED_ROWS
        # float -> int32 cast truncates toward zero, matching .long()
        m_idx = (x[:, g * f:g * f + 1] * 12.0).astype(jnp.int32)  # (tr, 1)
        h = cols == (m_idx + base)
        if f > 1:
            d_idx = (x[:, g * f + 1:g * f + 2] * 31.0).astype(jnp.int32)
            h = h | (cols == (d_idx + (base + MONTH_SIZE)))
        hot = h if hot is None else (hot | h)

    oh = hot.astype(jnp.float32)
    out_ref[...] = jnp.dot(
        oh, tbl_ref[...], preferred_element_type=jnp.float32
    ).astype(out_ref.dtype)


def temporal_embedding(x, params, *, tile_n=8192):
    """Pallas forward of TemporalEmbedding. x: (N, f) float32 -> (N, time_dim)."""
    n, f = x.shape
    month_tbl = params["month"].astype(jnp.float32)
    day_tbl = params["day"].astype(jnp.float32)
    time_dim = month_tbl.shape[1]

    # Lane-dense folding: smallest fold with (fold * time_dim) % 128 == 0.
    ideal_fold = 128 // math.gcd(time_dim, 128)
    fold = ideal_fold if ideal_fold <= 16 else 1
    # TODO(synk): time_dim < 8 falls back to fold=1 (masked stores); not a DSformer config.

    # Fused [month | day | pad] table, replicated block-diagonally for the folded
    # layout: row-group g's one-hot columns [g*48, (g+1)*48) hit lanes [g*D, (g+1)*D).
    t48 = jnp.concatenate(
        [month_tbl, day_tbl,
         jnp.zeros((FUSED_ROWS - MONTH_SIZE - DAY_SIZE, time_dim), jnp.float32)],
        axis=0)
    tbl = jnp.kron(jnp.eye(fold, dtype=jnp.float32), t48) if fold > 1 else t48

    # Tiling over packed rows (each packed row = `fold` original rows).
    packed_w = fold * time_dim
    nr_raw = pl.cdiv(n, fold)
    tile_r = max(8, (tile_n // fold) // 8 * 8)                 # big tile, mult of 8
    # Keep the output tile <= ~2 MiB so double-buffering stays well inside scoped VMEM.
    vmem_cap_rows = max(8, ((2 * 1024 * 1024) // (packed_w * 4)) // 8 * 8)
    tile_r = min(tile_r, vmem_cap_rows)
    tile_r = min(tile_r, ((nr_raw + 7) // 8) * 8)              # don't exceed data
    nr = ((nr_raw + tile_r - 1) // tile_r) * tile_r            # grid-aligned rows
    n_pad = nr * fold

    x_p = x.astype(jnp.float32)
    if n_pad != n:
        # Zero rows map to valid table rows (month 0 / day 0); sliced away below.
        x_p = jnp.pad(x_p, ((0, n_pad - n), (0, 0)))
    x_packed = x_p.reshape(nr, fold * f)                       # free row-major reshape

    grid = (nr // tile_r,)
    kernel = functools.partial(_embed_kernel, f=f, fold=fold)

    out_packed = pl.pallas_call(
        kernel,
        out_shape=jax.ShapeDtypeStruct((nr, packed_w), jnp.float32),
        grid=grid,
        in_specs=[
            pl.BlockSpec((tile_r, fold * f), lambda i: (i, 0)),
            pl.BlockSpec((fold * FUSED_ROWS, packed_w), lambda i: (0, 0)),
        ],
        out_specs=pl.BlockSpec((tile_r, packed_w), lambda i: (i, 0)),
        compiler_params=pltpu.CompilerParams(
            dimension_semantics=("parallel",)),
    )(x_packed, tbl)

    out = out_packed.reshape(n_pad, time_dim)                  # free row-major reshape
    return out[:n] if n_pad != n else out


def _xavier_uniform(key, shape):
    # torch xavier_uniform_ on a (num_embeddings, dim) weight
    bound = math.sqrt(6.0 / (shape[0] + shape[1]))
    return jax.random.uniform(key, shape, jnp.float32, -bound, bound)


def init_params(key, time_dim):
    k_hour, k_day, k_month = jax.random.split(key, 3)
    return {
        # hour table exists in the module but is unused in forward (parity only)
        "hour": _xavier_uniform(k_hour, (HOUR_SIZE, time_dim)),
        "day": _xavier_uniform(k_day, (DAY_SIZE, time_dim)),
        "month": _xavier_uniform(k_month, (MONTH_SIZE, time_dim)),
    }


def _reference(x, params):
    # Plain-JAX reference for correctness check.
    month_idx = (x[:, 0] * 12.0).astype(jnp.int32)
    out = jnp.take(params["month"], month_idx, axis=0)
    if x.shape[1] > 1:
        day_idx = (x[:, 1] * 31.0).astype(jnp.int32)
        out = out + jnp.take(params["day"], day_idx, axis=0)
    return out


if __name__ == "__main__":
    key = jax.random.PRNGKey(0)
    k_param, k_x = jax.random.split(key)

    time_dim = 32
    n, f = 250, 2  # non-multiple N exercises the pad/slice path

    params = init_params(k_param, time_dim)
    # Inputs in [0, 1), as the module's scaling (x*31, x*12) implies normalized features.
    x = jax.random.uniform(k_x, (n, f), jnp.float32)

    out = temporal_embedding(x, params)
    out = jax.block_until_ready(out)

    ref = _reference(x, params)
    assert out.shape == (n, time_dim)
    assert jnp.allclose(out, ref, atol=1e-5, rtol=1e-5)

    print("KERNEL_OK")
</pallas_src>

<mosaic_0001>
module attributes {stable_mosaic.version = 11 : i64} {
  func.func @_embed_kernel(%arg0: i32, %arg1: memref<64x8xf32, #tpu.memory_space<vmem>>, %arg2: memref<192x128xf32, #tpu.memory_space<vmem>>, %arg3: memref<64x128xf32, #tpu.memory_space<vmem>>) attributes {dimension_semantics = [#tpu.dimension_semantics<parallel>], iteration_bounds = array<i64: 1>, scalar_prefetch = 0 : i64, scratch_operands = 0 : i64, tpu.core_type = #tpu.core_type<tc>, window_params = [{transform_indices = @transform_0, window_bounds = array<i64: 64, 8>}, {pipeline_mode = #tpu.pipeline_mode<synchronous>, transform_indices = @transform_1, window_bounds = array<i64: 192, 128>}, {transform_indices = @transform_2, window_bounds = array<i64: 64, 128>}]} {
    %c0 = arith.constant 0 : index
    %c0_0 = arith.constant 0 : index
    %0 = vector.load %arg1[%c0, %c0_0] : memref<64x8xf32, #tpu.memory_space<vmem>>, vector<64x8xf32>
    %1 = tpu.iota {dimensions = array<i32: 1>} : vector<64x192xi32>
    %2 = vector.extract_strided_slice %0 {offsets = [0, 0], sizes = [64, 1], strides = [1, 1]} : vector<64x8xf32> to vector<64x1xf32>
    %cst = arith.constant 1.200000e+01 : f32
    %3 = vector.broadcast %cst : f32 to vector<64x1xf32>
    %4 = arith.mulf %2, %3 : vector<64x1xf32>
    %5 = arith.fptosi %4 : vector<64x1xf32> to vector<64x1xi32>
    %c0_i32 = arith.constant 0 : i32
    %6 = vector.broadcast %c0_i32 : i32 to vector<64x1xi32>
    %7 = arith.addi %5, %6 : vector<64x1xi32>
    %8 = vector.broadcast %7 : vector<64x1xi32> to vector<64x192xi32>
    %9 = arith.cmpi eq, %1, %8 : vector<64x192xi32>
    %10 = vector.extract_strided_slice %0 {offsets = [0, 1], sizes = [64, 1], strides = [1, 1]} : vector<64x8xf32> to vector<64x1xf32>
    %cst_1 = arith.constant 3.100000e+01 : f32
    %11 = vector.broadcast %cst_1 : f32 to vector<64x1xf32>
    %12 = arith.mulf %10, %11 : vector<64x1xf32>
    %13 = arith.fptosi %12 : vector<64x1xf32> to vector<64x1xi32>
    %c13_i32 = arith.constant 13 : i32
    %14 = vector.broadcast %c13_i32 : i32 to vector<64x1xi32>
    %15 = arith.addi %13, %14 : vector<64x1xi32>
    %16 = vector.broadcast %15 : vector<64x1xi32> to vector<64x192xi32>
    %17 = arith.cmpi eq, %1, %16 : vector<64x192xi32>
    %18 = arith.ori %9, %17 : vector<64x192xi1>
    %19 = vector.extract_strided_slice %0 {offsets = [0, 2], sizes = [64, 1], strides = [1, 1]} : vector<64x8xf32> to vector<64x1xf32>
    %cst_2 = arith.constant 1.200000e+01 : f32
    %20 = vector.broadcast %cst_2 : f32 to vector<64x1xf32>
    %21 = arith.mulf %19, %20 : vector<64x1xf32>
    %22 = arith.fptosi %21 : vector<64x1xf32> to vector<64x1xi32>
    %c48_i32 = arith.constant 48 : i32
    %23 = vector.broadcast %c48_i32 : i32 to vector<64x1xi32>
    %24 = arith.addi %22, %23 : vector<64x1xi32>
    %25 = vector.broadcast %24 : vector<64x1xi32> to vector<64x192xi32>
    %26 = arith.cmpi eq, %1, %25 : vector<64x192xi32>
    %27 = vector.extract_strided_slice %0 {offsets = [0, 3], sizes = [64, 1], strides = [1, 1]} : vector<64x8xf32> to vector<64x1xf32>
    %cst_3 = arith.constant 3.100000e+01 : f32
    %28 = vector.broadcast %cst_3 : f32 to vector<64x1xf32>
    %29 = arith.mulf %27, %28 : vector<64x1xf32>
    %30 = arith.fptosi %29 : vector<64x1xf32> to vector<64x1xi32>
    %c61_i32 = arith.constant 61 : i32
    %31 = vector.broadcast %c61_i32 : i32 to vector<64x1xi32>
    %32 = arith.addi %30, %31 : vector<64x1xi32>
    %33 = vector.broadcast %32 : vector<64x1xi32> to vector<64x192xi32>
    %34 = arith.cmpi eq, %1, %33 : vector<64x192xi32>
    %35 = arith.ori %26, %34 : vector<64x192xi1>
    %36 = arith.ori %18, %35 : vector<64x192xi1>
    %37 = vector.extract_strided_slice %0 {offsets = [0, 4], sizes = [64, 1], strides = [1, 1]} : vector<64x8xf32> to vector<64x1xf32>
    %cst_4 = arith.constant 1.200000e+01 : f32
    %38 = vector.broadcast %cst_4 : f32 to vector<64x1xf32>
    %39 = arith.mulf %37, %38 : vector<64x1xf32>
    %40 = arith.fptosi %39 : vector<64x1xf32> to vector<64x1xi32>
    %c96_i32 = arith.constant 96 : i32
    %41 = vector.broadcast %c96_i32 : i32 to vector<64x1xi32>
    %42 = arith.addi %40, %41 : vector<64x1xi32>
    %43 = vector.broadcast %42 : vector<64x1xi32> to vector<64x192xi32>
    %44 = arith.cmpi eq, %1, %43 : vector<64x192xi32>
    %45 = vector.extract_strided_slice %0 {offsets = [0, 5], sizes = [64, 1], strides = [1, 1]} : vector<64x8xf32> to vector<64x1xf32>
    %cst_5 = arith.constant 3.100000e+01 : f32
    %46 = vector.broadcast %cst_5 : f32 to vector<64x1xf32>
    %47 = arith.mulf %45, %46 : vector<64x1xf32>
    %48 = arith.fptosi %47 : vector<64x1xf32> to vector<64x1xi32>
    %c109_i32 = arith.constant 109 : i32
    %49 = vector.broadcast %c109_i32 : i32 to vector<64x1xi32>
    %50 = arith.addi %48, %49 : vector<64x1xi32>
    %51 = vector.broadcast %50 : vector<64x1xi32> to vector<64x192xi32>
    %52 = arith.cmpi eq, %1, %51 : vector<64x192xi32>
    %53 = arith.ori %44, %52 : vector<64x192xi1>
    %54 = arith.ori %36, %53 : vector<64x192xi1>
    %55 = vector.extract_strided_slice %0 {offsets = [0, 6], sizes = [64, 1], strides = [1, 1]} : vector<64x8xf32> to vector<64x1xf32>
    %cst_6 = arith.constant 1.200000e+01 : f32
    %56 = vector.broadcast %cst_6 : f32 to vector<64x1xf32>
    %57 = arith.mulf %55, %56 : vector<64x1xf32>
    %58 = arith.fptosi %57 : vector<64x1xf32> to vector<64x1xi32>
    %c144_i32 = arith.constant 144 : i32
    %59 = vector.broadcast %c144_i32 : i32 to vector<64x1xi32>
    %60 = arith.addi %58, %59 : vector<64x1xi32>
    %61 = vector.broadcast %60 : vector<64x1xi32> to vector<64x192xi32>
    %62 = arith.cmpi eq, %1, %61 : vector<64x192xi32>
    %63 = vector.extract_strided_slice %0 {offsets = [0, 7], sizes = [64, 1], strides = [1, 1]} : vector<64x8xf32> to vector<64x1xf32>
    %cst_7 = arith.constant 3.100000e+01 : f32
    %64 = vector.broadcast %cst_7 : f32 to vector<64x1xf32>
    %65 = arith.mulf %63, %64 : vector<64x1xf32>
    %66 = arith.fptosi %65 : vector<64x1xf32> to vector<64x1xi32>
    %c157_i32 = arith.constant 157 : i32
    %67 = vector.broadcast %c157_i32 : i32 to vector<64x1xi32>
    %68 = arith.addi %66, %67 : vector<64x1xi32>
    %69 = vector.broadcast %68 : vector<64x1xi32> to vector<64x192xi32>
    %70 = arith.cmpi eq, %1, %69 : vector<64x192xi32>
    %71 = arith.ori %62, %70 : vector<64x192xi1>
    %72 = arith.ori %54, %71 : vector<64x192xi1>
    %73 = arith.extui %72 : vector<64x192xi1> to vector<64x192xi32>
    %74 = arith.sitofp %73 : vector<64x192xi32> to vector<64x192xf32>
    %c0_8 = arith.constant 0 : index
    %c0_9 = arith.constant 0 : index
    %75 = vector.load %arg2[%c0_8, %c0_9] : memref<192x128xf32, #tpu.memory_space<vmem>>, vector<192x128xf32>
    %cst_10 = arith.constant dense<0.000000e+00> : vector<64x128xf32>
    %76 = tpu.matmul %74, %75, %cst_10 {dimension_numbers = #tpu.dot_dimension_numbers<[1], [0], [0], [1], [0, 0, 1, 1], [], []>} : vector<64x192xf32>, vector<192x128xf32>, vector<64x128xf32> -> vector<64x128xf32>
    %c0_11 = arith.constant 0 : index
    %c0_12 = arith.constant 0 : index
    %77 = vector.load %arg3[%c0_11, %c0_12] : memref<64x128xf32, #tpu.memory_space<vmem>>, vector<64x128xf32>
    tpu.vector_store %arg3[%c0_11, %c0_12], %76 {strides = array<i32>} : memref<64x128xf32, #tpu.memory_space<vmem>>, vector<64x128xf32>,
    return
  }
  func.func @transform_0(%arg0: i32) -> (i32, i32) {
    %c0_i32 = arith.constant 0 : i32
    %c0_i32_0 = arith.constant 0 : i32
    return %arg0, %c0_i32 : i32, i32
  }
  func.func @transform_1(%arg0: i32) -> (i32, i32) {
    %c0_i32 = arith.constant 0 : i32
    %c0_i32_0 = arith.constant 0 : i32
    %c0_i32_1 = arith.constant 0 : i32
    return %c0_i32, %c0_i32_0 : i32, i32
  }
  func.func @transform_2(%arg0: i32) -> (i32, i32) {
    %c0_i32 = arith.constant 0 : i32
    %c0_i32_0 = arith.constant 0 : i32
    return %arg0, %c0_i32 : i32, i32
  }
}

</mosaic_0001>

<llo_original>
// kernel: tpu_custom_call.1
$region0: #{tpu_custom_call.1}
  #allocation0 [shape = 'u32[]', space=smem, size = 0x4, offset = 0x4, fixed_abs, tag = 'smem constant byte address 0x4 - core index']
  #allocation1 [shape = 'u32[144,128]{1,0:T(1,128)}', space=vmem, size = 0x12000, scoped, tag = 'internal scratch']
  %s0 = inlined_call_operand.vmem [shape: f32[64,8], index: 0, kind: input, shape index: {}]
  %s1 = inlined_call_operand.hbm [shape: f32[192,128], index: 1, kind: input, shape index: {}]
  %s2 = inlined_call_operand.hbm [shape: f32[64,128], index: 2, kind: output, shape index: {}]
  %s3 = sld [smem:[#allocation0]]
  $region22: #{tpu_custom_call.1} parent=0
    _
  %s5 = ssub.s32 1, %s3
  %s6 = scalar_select 0, %s5, %s3
  $region1: #{tpu_custom_call.1} parent=0
    #allocation2 [shape = 'u8[98304]{0}', space=vmem, size = 0x18000, scoped, tag = 'input window, operand 1, single buffered']
    #allocation3 [shape = 's32[1]{0}', space=sflag, size = 0x4, scoped, tag = 'scoped memory for tpu_custom_call.1']
    #allocation4 [shape = 's32[1]{0}', space=sflag, size = 0x4, scoped, tag = 'scoped memory for tpu_custom_call.1']
    #allocation5 [shape = 'u8[32768]{0}', space=vmem, size = 0x8000, scoped, tag = 'output window, operand 0, single buffered']
    %7 = vsyncpa [#allocation3], 0
    %8 = vsyncpa [#allocation4], 0
    // Predicated region
    $region2: #{tpu_custom_call.1} parent=1 // pred_check
      _
    $region3: #{tpu_custom_call.1} parent=1 // pred_check_branch
      %10 = sbr.rel (0) target = $region5
    $region4: #{tpu_custom_call.1} parent=1 // pred_region
      _
    $region5: #{tpu_custom_call.1} parent=1 // pred_fallthru
      _
    // Predicated region
    $region6: #{tpu_custom_call.1} parent=1 // pred_check
      _
    $region7: #{tpu_custom_call.1} parent=1 // pred_check_branch
      %12 = sbr.rel (0) target = $region9
    $region8: #{tpu_custom_call.1} parent=1 // pred_region
      %s14 = ssub.s32 3072, 3072
      %15 = vsyncadd [#allocation3], %s14
      %s16 = sshll.u32 [#allocation2], 4
      %s17 = int_to_ptr.vmem [resolvable:$true] %s16
      %22 = dma.hbm_to_vmem [thread:$0]  %s1, 3072, %s17, [#allocation3], 128, 128, 8
    $region9: #{tpu_custom_call.1} parent=1 // pred_fallthru
      _
    // Predicated region
    $region10: #{tpu_custom_call.1} parent=1 // pred_check
      _
    $region11: #{tpu_custom_call.1} parent=1 // pred_check_branch
      %24 = sbr.rel (0) target = $region13
    $region12: #{tpu_custom_call.1} parent=1 // pred_region
      %25 = dma.done [#allocation3], 3072
    $region13: #{tpu_custom_call.1} parent=1 // pred_fallthru
      _
    %v26 = vld [vmem:[%s0] sm:$0xff]
    %v27 = vld [vmem:[%s0 + $0x8] sm:$0xff]
    %v28 = vld [vmem:[%s0 + $0x10] sm:$0xff]
    %v29 = vld [vmem:[%s0 + $0x18] sm:$0xff]
    %v30 = vld [vmem:[%s0 + $0x20] sm:$0xff]
    %v31 = vld [vmem:[%s0 + $0x28] sm:$0xff]
    %v32 = vld [vmem:[%s0 + $0x30] sm:$0xff]
    %v33 = vld [vmem:[%s0 + $0x38] sm:$0xff]
    %v34 = vlaneseq
    %v35 = vand.u32 %v34, 127
    %v36 = vadd.s32 %v35, 128
    %v37 = vmul.f32 %v26, 12.0
    %v38 = vmul.f32 %v27, 12.0
    %v39 = vmul.f32 %v28, 12.0
    %v40 = vmul.f32 %v29, 12.0
    %v41 = vmul.f32 %v30, 12.0
    %v42 = vmul.f32 %v31, 12.0
    %v43 = vmul.f32 %v32, 12.0
    %v44 = vmul.f32 %v33, 12.0
    %v45 = vcvt.f32.s32.to.zero.pseudo %v37
    %v46 = vcvt.f32.s32.to.zero.pseudo %v38
    %v47 = vcvt.f32.s32.to.zero.pseudo %v39
    %v48 = vcvt.f32.s32.to.zero.pseudo %v40
    %v49 = vcvt.f32.s32.to.zero.pseudo %v41
    %v50 = vcvt.f32.s32.to.zero.pseudo %v42
    %v51 = vcvt.f32.s32.to.zero.pseudo %v43
    %v52 = vcvt.f32.s32.to.zero.pseudo %v44
    %53 = vset.pattern.permute.xlu0 0
    %54 = vperm.xlu0 %53, %v45
    %v55 = vpop.permute.xlu0 %54
    %56 = vset.pattern.permute.xlu0 0
    %57 = vperm.xlu0 %56, %v46
    %v58 = vpop.permute.xlu0 %57
    %59 = vset.pattern.permute.xlu0 0
    %60 = vperm.xlu0 %59, %v47
    %v61 = vpop.permute.xlu0 %60
    %62 = vset.pattern.permute.xlu0 0
    %63 = vperm.xlu0 %62, %v48
    %v64 = vpop.permute.xlu0 %63
    %65 = vset.pattern.permute.xlu0 0
    %66 = vperm.xlu0 %65, %v49
    %v67 = vpop.permute.xlu0 %66
    %68 = vset.pattern.permute.xlu0 0
    %69 = vperm.xlu0 %68, %v50
    %v70 = vpop.permute.xlu0 %69
    %71 = vset.pattern.permute.xlu0 0
    %72 = vperm.xlu0 %71, %v51
    %v73 = vpop.permute.xlu0 %72
    %74 = vset.pattern.permute.xlu0 0
    %75 = vperm.xlu0 %74, %v52
    %v76 = vpop.permute.xlu0 %75
    %vm77 = vcmp.eq.s32.totalorder %v35, %v55
    %vm78 = vcmp.eq.s32.totalorder %v36, %v55
    %vm79 = vcmp.eq.s32.totalorder %v35, %v58
    %vm80 = vcmp.eq.s32.totalorder %v36, %v58
    %vm81 = vcmp.eq.s32.totalorder %v35, %v61
    %vm82 = vcmp.eq.s32.totalorder %v36, %v61
    %vm83 = vcmp.eq.s32.totalorder %v35, %v64
    %vm84 = vcmp.eq.s32.totalorder %v36, %v64
    %vm85 = vcmp.eq.s32.totalorder %v35, %v67
    %vm86 = vcmp.eq.s32.totalorder %v36, %v67
    %vm87 = vcmp.eq.s32.totalorder %v35, %v70
    %vm88 = vcmp.eq.s32.totalorder %v36, %v70
    %vm89 = vcmp.eq.s32.totalorder %v35, %v73
    %vm90 = vcmp.eq.s32.totalorder %v36, %v73
    %vm91 = vcmp.eq.s32.totalorder %v35, %v76
    %vm92 = vcmp.eq.s32.totalorder %v36, %v76
    %v93 = vmul.f32 %v26, 31.0
    %v94 = vmul.f32 %v27, 31.0
    %v95 = vmul.f32 %v28, 31.0
    %v96 = vmul.f32 %v29, 31.0
    %v97 = vmul.f32 %v30, 31.0
    %v98 = vmul.f32 %v31, 31.0
    %v99 = vmul.f32 %v32, 31.0
    %v100 = vmul.f32 %v33, 31.0
    %v101 = vcvt.f32.s32.to.zero.pseudo %v93
    %v102 = vcvt.f32.s32.to.zero.pseudo %v94
    %v103 = vcvt.f32.s32.to.zero.pseudo %v95
    %v104 = vcvt.f32.s32.to.zero.pseudo %v96
    %v105 = vcvt.f32.s32.to.zero.pseudo %v97
    %v106 = vcvt.f32.s32.to.zero.pseudo %v98
    %v107 = vcvt.f32.s32.to.zero.pseudo %v99
    %v108 = vcvt.f32.s32.to.zero.pseudo %v100
    %v109 = vadd.s32 %v101, 13
    %v110 = vadd.s32 %v102, 13
    %v111 = vadd.s32 %v103, 13
    %v112 = vadd.s32 %v104, 13
    %v113 = vadd.s32 %v105, 13
    %v114 = vadd.s32 %v106, 13
    %v115 = vadd.s32 %v107, 13
    %v116 = vadd.s32 %v108, 13
    %117 = vset.pattern.permute.xlu0 1
    %118 = vperm.xlu0 %117, %v109
    %v119 = vpop.permute.xlu0 %118
    %120 = vset.pattern.permute.xlu0 1
    %121 = vperm.xlu0 %120, %v110
    %v122 = vpop.permute.xlu0 %121
    %123 = vset.pattern.permute.xlu0 1
    %124 = vperm.xlu0 %123, %v111
    %v125 = vpop.permute.xlu0 %124
    %126 = vset.pattern.permute.xlu0 1
    %127 = vperm.xlu0 %126, %v112
    %v128 = vpop.permute.xlu0 %127
    %129 = vset.pattern.permute.xlu0 1
    %130 = vperm.xlu0 %129, %v113
    %v131 = vpop.permute.xlu0 %130
    %132 = vset.pattern.permute.xlu0 1
    %133 = vperm.xlu0 %132, %v114
    %v134 = vpop.permute.xlu0 %133
    %135 = vset.pattern.permute.xlu0 1
    %136 = vperm.xlu0 %135, %v115
    %v137 = vpop.permute.xlu0 %136
    %138 = vset.pattern.permute.xlu0 1
    %139 = vperm.xlu0 %138, %v116
    %v140 = vpop.permute.xlu0 %139
    %vm141 = vcmp.eq.s32.totalorder %v35, %v119
    %vm142 = vcmp.eq.s32.totalorder %v36, %v119
    %vm143 = vcmp.eq.s32.totalorder %v35, %v122
    %vm144 = vcmp.eq.s32.totalorder %v36, %v122
    %vm145 = vcmp.eq.s32.totalorder %v35, %v125
    %vm146 = vcmp.eq.s32.totalorder %v36, %v125
    %vm147 = vcmp.eq.s32.totalorder %v35, %v128
    %vm148 = vcmp.eq.s32.totalorder %v36, %v128
    %vm149 = vcmp.eq.s32.totalorder %v35, %v131
    %vm150 = vcmp.eq.s32.totalorder %v36, %v131
    %vm151 = vcmp.eq.s32.totalorder %v35, %v134
    %vm152 = vcmp.eq.s32.totalorder %v36, %v134
    %vm153 = vcmp.eq.s32.totalorder %v35, %v137
    %vm154 = vcmp.eq.s32.totalorder %v36, %v137
    %vm155 = vcmp.eq.s32.totalorder %v35, %v140
    %vm156 = vcmp.eq.s32.totalorder %v36, %v140
    %vm157 = vmor %vm77, %vm141
    %vm158 = vmor %vm78, %vm142
    %vm159 = vmor %vm79, %vm143
    %vm160 = vmor %vm80, %vm144
    %vm161 = vmor %vm81, %vm145
    %vm162 = vmor %vm82, %vm146
    %vm163 = vmor %vm83, %vm147
    %vm164 = vmor %vm84, %vm148
    %vm165 = vmor %vm85, %vm149
    %vm166 = vmor %vm86, %vm150
    %vm167 = vmor %vm87, %vm151
    %vm168 = vmor %vm88, %vm152
    %vm169 = vmor %vm89, %vm153
    %vm170 = vmor %vm90, %vm154
    %vm171 = vmor %vm91, %vm155
    %vm172 = vmor %vm92, %vm156
    %v173 = vadd.s32 %v45, 48
    %v174 = vadd.s32 %v46, 48
    %v175 = vadd.s32 %v47, 48
    %v176 = vadd.s32 %v48, 48
    %v177 = vadd.s32 %v49, 48
    %v178 = vadd.s32 %v50, 48
    %v179 = vadd.s32 %v51, 48
    %v180 = vadd.s32 %v52, 48
    %181 = vset.pattern.permute.xlu0 2
    %182 = vperm.xlu0 %181, %v173
    %v183 = vpop.permute.xlu0 %182
    %184 = vset.pattern.permute.xlu0 2
    %185 = vperm.xlu0 %184, %v174
    %v186 = vpop.permute.xlu0 %185
    %187 = vset.pattern.permute.xlu0 2
    %188 = vperm.xlu0 %187, %v175
    %v189 = vpop.permute.xlu0 %188
    %190 = vset.pattern.permute.xlu0 2
    %191 = vperm.xlu0 %190, %v176
    %v192 = vpop.permute.xlu0 %191
    %193 = vset.pattern.permute.xlu0 2
    %194 = vperm.xlu0 %193, %v177
    %v195 = vpop.permute.xlu0 %194
    %196 = vset.pattern.permute.xlu0 2
    %197 = vperm.xlu0 %196, %v178
    %v198 = vpop.permute.xlu0 %197
    %199 = vset.pattern.permute.xlu0 2
    %200 = vperm.xlu0 %199, %v179
    %v201 = vpop.permute.xlu0 %200
    %202 = vset.pattern.permute.xlu0 2
    %203 = vperm.xlu0 %202, %v180
    %v204 = vpop.permute.xlu0 %203
    %vm205 = vcmp.eq.s32.totalorder %v35, %v183
    %vm206 = vcmp.eq.s32.totalorder %v36, %v183
    %vm207 = vcmp.eq.s32.totalorder %v35, %v186
    %vm208 = vcmp.eq.s32.totalorder %v36, %v186
    %vm209 = vcmp.eq.s32.totalorder %v35, %v189
    %vm210 = vcmp.eq.s32.totalorder %v36, %v189
    %vm211 = vcmp.eq.s32.totalorder %v35, %v192
    %vm212 = vcmp.eq.s32.totalorder %v36, %v192
    %vm213 = vcmp.eq.s32.totalorder %v35, %v195
    %vm214 = vcmp.eq.s32.totalorder %v36, %v195
    %vm215 = vcmp.eq.s32.totalorder %v35, %v198
    %vm216 = vcmp.eq.s32.totalorder %v36, %v198
    %vm217 = vcmp.eq.s32.totalorder %v35, %v201
    %vm218 = vcmp.eq.s32.totalorder %v36, %v201
    %vm219 = vcmp.eq.s32.totalorder %v35, %v204
    %vm220 = vcmp.eq.s32.totalorder %v36, %v204
    %v221 = vadd.s32 %v101, 61
    %v222 = vadd.s32 %v102, 61
    %v223 = vadd.s32 %v103, 61
    %v224 = vadd.s32 %v104, 61
    %v225 = vadd.s32 %v105, 61
    %v226 = vadd.s32 %v106, 61
    %v227 = vadd.s32 %v107, 61
    %v228 = vadd.s32 %v108, 61
    %229 = vset.pattern.permute.xlu0 3
    %230 = vperm.xlu0 %229, %v221
    %v231 = vpop.permute.xlu0 %230
    %232 = vset.pattern.permute.xlu0 3
    %233 = vperm.xlu0 %232, %v222
    %v234 = vpop.permute.xlu0 %233
    %235 = vset.pattern.permute.xlu0 3
    %236 = vperm.xlu0 %235, %v223
    %v237 = vpop.permute.xlu0 %236
    %238 = vset.pattern.permute.xlu0 3
    %239 = vperm.xlu0 %238, %v224
    %v240 = vpop.permute.xlu0 %239
    %241 = vset.pattern.permute.xlu0 3
    %242 = vperm.xlu0 %241, %v225
    %v243 = vpop.permute.xlu0 %242
    %244 = vset.pattern.permute.xlu0 3
    %245 = vperm.xlu0 %244, %v226
    %v246 = vpop.permute.xlu0 %245
    %247 = vset.pattern.permute.xlu0 3
    %248 = vperm.xlu0 %247, %v227
    %v249 = vpop.permute.xlu0 %248
    %250 = vset.pattern.permute.xlu0 3
    %251 = vperm.xlu0 %250, %v228
    %v252 = vpop.permute.xlu0 %251
    %vm253 = vcmp.eq.s32.totalorder %v35, %v231
    %vm254 = vcmp.eq.s32.totalorder %v36, %v231
    %vm255 = vcmp.eq.s32.totalorder %v35, %v234
    %vm256 = vcmp.eq.s32.totalorder %v36, %v234
    %vm257 = vcmp.eq.s32.totalorder %v35, %v237
    %vm258 = vcmp.eq.s32.totalorder %v36, %v237
    %vm259 = vcmp.eq.s32.totalorder %v35, %v240
    %vm260 = vcmp.eq.s32.totalorder %v36, %v240
    %vm261 = vcmp.eq.s32.totalorder %v35, %v243
    %vm262 = vcmp.eq.s32.totalorder %v36, %v243
    %vm263 = vcmp.eq.s32.totalorder %v35, %v246
    %vm264 = vcmp.eq.s32.totalorder %v36, %v246
    %vm265 = vcmp.eq.s32.totalorder %v35, %v249
    %vm266 = vcmp.eq.s32.totalorder %v36, %v249
    %vm267 = vcmp.eq.s32.totalorder %v35, %v252
    %vm268 = vcmp.eq.s32.totalorder %v36, %v252
    %vm269 = vmor %vm205, %vm253
    %vm270 = vmor %vm206, %vm254
    %vm271 = vmor %vm207, %vm255
    %vm272 = vmor %vm208, %vm256
    %vm273 = vmor %vm209, %vm257
    %vm274 = vmor %vm210, %vm258
    %vm275 = vmor %vm211, %vm259
    %vm276 = vmor %vm212, %vm260
    %vm277 = vmor %vm213, %vm261
    %vm278 = vmor %vm214, %vm262
    %vm279 = vmor %vm215, %vm263
    %vm280 = vmor %vm216, %vm264
    %vm281 = vmor %vm217, %vm265
    %vm282 = vmor %vm218, %vm266
    %vm283 = vmor %vm219, %vm267
    %vm284 = vmor %vm220, %vm268
    %vm285 = vmor %vm157, %vm269
    %vm286 = vmor %vm158, %vm270
    %vm287 = vmor %vm159, %vm271
    %vm288 = vmor %vm160, %vm272
    %vm289 = vmor %vm161, %vm273
    %vm290 = vmor %vm162, %vm274
    %vm291 = vmor %vm163, %vm275
    %vm292 = vmor %vm164, %vm276
    %vm293 = vmor %vm165, %vm277
    %vm294 = vmor %vm166, %vm278
    %vm295 = vmor %vm167, %vm279
    %vm296 = vmor %vm168, %vm280
    %vm297 = vmor %vm169, %vm281
    %vm298 = vmor %vm170, %vm282
    %vm299 = vmor %vm171, %vm283
    %vm300 = vmor %vm172, %vm284
    %v301 = vadd.s32 %v45, 96
    %v302 = vadd.s32 %v46, 96
    %v303 = vadd.s32 %v47, 96
    %v304 = vadd.s32 %v48, 96
    %v305 = vadd.s32 %v49, 96
    %v306 = vadd.s32 %v50, 96
    %v307 = vadd.s32 %v51, 96
    %v308 = vadd.s32 %v52, 96
    %309 = vset.pattern.permute.xlu0 4
    %310 = vperm.xlu0 %309, %v301
    %v311 = vpop.permute.xlu0 %310
    %312 = vset.pattern.permute.xlu0 4
    %313 = vperm.xlu0 %312, %v302
    %v314 = vpop.permute.xlu0 %313
    %315 = vset.pattern.permute.xlu0 4
    %316 = vperm.xlu0 %315, %v303
    %v317 = vpop.permute.xlu0 %316
    %318 = vset.pattern.permute.xlu0 4
    %319 = vperm.xlu0 %318, %v304
    %v320 = vpop.permute.xlu0 %319
    %321 = vset.pattern.permute.xlu0 4
    %322 = vperm.xlu0 %321, %v305
    %v323 = vpop.permute.xlu0 %322
    %324 = vset.pattern.permute.xlu0 4
    %325 = vperm.xlu0 %324, %v306
    %v326 = vpop.permute.xlu0 %325
    %327 = vset.pattern.permute.xlu0 4
    %328 = vperm.xlu0 %327, %v307
    %v329 = vpop.permute.xlu0 %328
    %330 = vset.pattern.permute.xlu0 4
    %331 = vperm.xlu0 %330, %v308
    %v332 = vpop.permute.xlu0 %331
    %vm333 = vcmp.eq.s32.totalorder %v35, %v311
    %vm334 = vcmp.eq.s32.totalorder %v36, %v311
    %vm335 = vcmp.eq.s32.totalorder %v35, %v314
    %vm336 = vcmp.eq.s32.totalorder %v36, %v314
    %vm337 = vcmp.eq.s32.totalorder %v35, %v317
    %vm338 = vcmp.eq.s32.totalorder %v36, %v317
    %vm339 = vcmp.eq.s32.totalorder %v35, %v320
    %vm340 = vcmp.eq.s32.totalorder %v36, %v320
    %vm341 = vcmp.eq.s32.totalorder %v35, %v323
    %vm342 = vcmp.eq.s32.totalorder %v36, %v323
    %vm343 = vcmp.eq.s32.totalorder %v35, %v326
    %vm344 = vcmp.eq.s32.totalorder %v36, %v326
    %vm345 = vcmp.eq.s32.totalorder %v35, %v329
    %vm346 = vcmp.eq.s32.totalorder %v36, %v329
    %vm347 = vcmp.eq.s32.totalorder %v35, %v332
    %vm348 = vcmp.eq.s32.totalorder %v36, %v332
    %v349 = vadd.s32 %v101, 109
    %v350 = vadd.s32 %v102, 109
    %v351 = vadd.s32 %v103, 109
    %v352 = vadd.s32 %v104, 109
    %v353 = vadd.s32 %v105, 109
    %v354 = vadd.s32 %v106, 109
    %v355 = vadd.s32 %v107, 109
    %v356 = vadd.s32 %v108, 109
    %357 = vset.pattern.permute.xlu0 5
    %358 = vperm.xlu0 %357, %v349
    %v359 = vpop.permute.xlu0 %358
    %360 = vset.pattern.permute.xlu0 5
    %361 = vperm.xlu0 %360, %v350
    %v362 = vpop.permute.xlu0 %361
    %363 = vset.pattern.permute.xlu0 5
    %364 = vperm.xlu0 %363, %v351
    %v365 = vpop.permute.xlu0 %364
    %366 = vset.pattern.permute.xlu0 5
    %367 = vperm.xlu0 %366, %v352
    %v368 = vpop.permute.xlu0 %367
    %369 = vset.pattern.permute.xlu0 5
    %370 = vperm.xlu0 %369, %v353
    %v371 = vpop.permute.xlu0 %370
    %372 = vset.pattern.permute.xlu0 5
    %373 = vperm.xlu0 %372, %v354
    %v374 = vpop.permute.xlu0 %373
    %375 = vset.pattern.permute.xlu0 5
    %376 = vperm.xlu0 %375, %v355
    %v377 = vpop.permute.xlu0 %376
    %378 = vset.pattern.permute.xlu0 5
    %379 = vperm.xlu0 %378, %v356
    %v380 = vpop.permute.xlu0 %379
    %vm381 = vcmp.eq.s32.totalorder %v35, %v359
    %vm382 = vcmp.eq.s32.totalorder %v36, %v359
    %vm383 = vcmp.eq.s32.totalorder %v35, %v362
    %vm384 = vcmp.eq.s32.totalorder %v36, %v362
    %vm385 = vcmp.eq.s32.totalorder %v35, %v365
    %vm386 = vcmp.eq.s32.totalorder %v36, %v365
    %vm387 = vcmp.eq.s32.totalorder %v35, %v368
    %vm388 = vcmp.eq.s32.totalorder %v36, %v368
    %vm389 = vcmp.eq.s32.totalorder %v35, %v371
    %vm390 = vcmp.eq.s32.totalorder %v36, %v371
    %vm391 = vcmp.eq.s32.totalorder %v35, %v374
    %vm392 = vcmp.eq.s32.totalorder %v36, %v374
    %vm393 = vcmp.eq.s32.totalorder %v35, %v377
    %vm394 = vcmp.eq.s32.totalorder %v36, %v377
    %vm395 = vcmp.eq.s32.totalorder %v35, %v380
    %vm396 = vcmp.eq.s32.totalorder %v36, %v380
    %vm397 = vmor %vm333, %vm381
    %vm398 = vmor %vm334, %vm382
    %vm399 = vmor %vm335, %vm383
    %vm400 = vmor %vm336, %vm384
    %vm401 = vmor %vm337, %vm385
    %vm402 = vmor %vm338, %vm386
    %vm403 = vmor %vm339, %vm387
    %vm404 = vmor %vm340, %vm388
    %vm405 = vmor %vm341, %vm389
    %vm406 = vmor %vm342, %vm390
    %vm407 = vmor %vm343, %vm391
    %vm408 = vmor %vm344, %vm392
    %vm409 = vmor %vm345, %vm393
    %vm410 = vmor %vm346, %vm394
    %vm411 = vmor %vm347, %vm395
    %vm412 = vmor %vm348, %vm396
    %vm413 = vmor %vm285, %vm397
    %vm414 = vmor %vm286, %vm398
    %vm415 = vmor %vm287, %vm399
    %vm416 = vmor %vm288, %vm400
    %vm417 = vmor %vm289, %vm401
    %vm418 = vmor %vm290, %vm402
    %vm419 = vmor %vm291, %vm403
    %vm420 = vmor %vm292, %vm404
    %vm421 = vmor %vm293, %vm405
    %vm422 = vmor %vm294, %vm406
    %vm423 = vmor %vm295, %vm407
    %vm424 = vmor %vm296, %vm408
    %vm425 = vmor %vm297, %vm409
    %vm426 = vmor %vm298, %vm410
    %vm427 = vmor %vm299, %vm411
    %vm428 = vmor %vm300, %vm412
    %v429 = vadd.s32 %v45, 144
    %v430 = vadd.s32 %v46, 144
    %v431 = vadd.s32 %v47, 144
    %v432 = vadd.s32 %v48, 144
    %v433 = vadd.s32 %v49, 144
    %v434 = vadd.s32 %v50, 144
    %v435 = vadd.s32 %v51, 144
    %v436 = vadd.s32 %v52, 144
    %437 = vset.pattern.permute.xlu0 6
    %438 = vperm.xlu0 %437, %v429
    %v439 = vpop.permute.xlu0 %438
    %440 = vset.pattern.permute.xlu0 6
    %441 = vperm.xlu0 %440, %v430
    %v442 = vpop.permute.xlu0 %441
    %443 = vset.pattern.permute.xlu0 6
    %444 = vperm.xlu0 %443, %v431
    %v445 = vpop.permute.xlu0 %444
    %446 = vset.pattern.permute.xlu0 6
    %447 = vperm.xlu0 %446, %v432
    %v448 = vpop.permute.xlu0 %447
    %449 = vset.pattern.permute.xlu0 6
    %450 = vperm.xlu0 %449, %v433
    %v451 = vpop.permute.xlu0 %450
    %452 = vset.pattern.permute.xlu0 6
    %453 = vperm.xlu0 %452, %v434
    %v454 = vpop.permute.xlu0 %453
    %455 = vset.pattern.permute.xlu0 6
    %456 = vperm.xlu0 %455, %v435
    %v457 = vpop.permute.xlu0 %456
    %458 = vset.pattern.permute.xlu0 6
    %459 = vperm.xlu0 %458, %v436
    %v460 = vpop.permute.xlu0 %459
    %vm461 = vcmp.eq.s32.totalorder %v35, %v439
    %vm462 = vcmp.eq.s32.totalorder %v36, %v439
    %vm463 = vcmp.eq.s32.totalorder %v35, %v442
    %vm464 = vcmp.eq.s32.totalorder %v36, %v442
    %vm465 = vcmp.eq.s32.totalorder %v35, %v445
    %vm466 = vcmp.eq.s32.totalorder %v36, %v445
    %vm467 = vcmp.eq.s32.totalorder %v35, %v448
    %vm468 = vcmp.eq.s32.totalorder %v36, %v448
    %vm469 = vcmp.eq.s32.totalorder %v35, %v451
    %vm470 = vcmp.eq.s32.totalorder %v36, %v451
    %vm471 = vcmp.eq.s32.totalorder %v35, %v454
    %vm472 = vcmp.eq.s32.totalorder %v36, %v454
    %vm473 = vcmp.eq.s32.totalorder %v35, %v457
    %vm474 = vcmp.eq.s32.totalorder %v36, %v457
    %vm475 = vcmp.eq.s32.totalorder %v35, %v460
    %vm476 = vcmp.eq.s32.totalorder %v36, %v460
    %v477 = vadd.s32 %v101, 157
    %v478 = vadd.s32 %v102, 157
    %v479 = vadd.s32 %v103, 157
    %v480 = vadd.s32 %v104, 157
    %v481 = vadd.s32 %v105, 157
    %v482 = vadd.s32 %v106, 157
    %v483 = vadd.s32 %v107, 157
    %v484 = vadd.s32 %v108, 157
    %485 = vset.pattern.permute.xlu0 7
    %486 = vperm.xlu0 %485, %v477
    %v487 = vpop.permute.xlu0 %486
    %488 = vset.pattern.permute.xlu0 7
    %489 = vperm.xlu0 %488, %v478
    %v490 = vpop.permute.xlu0 %489
    %491 = vset.pattern.permute.xlu0 7
    %492 = vperm.xlu0 %491, %v479
    %v493 = vpop.permute.xlu0 %492
    %494 = vset.pattern.permute.xlu0 7
    %495 = vperm.xlu0 %494, %v480
    %v496 = vpop.permute.xlu0 %495
    %497 = vset.pattern.permute.xlu0 7
    %498 = vperm.xlu0 %497, %v481
    %v499 = vpop.permute.xlu0 %498
    %500 = vset.pattern.permute.xlu0 7
    %501 = vperm.xlu0 %500, %v482
    %v502 = vpop.permute.xlu0 %501
    %503 = vset.pattern.permute.xlu0 7
    %504 = vperm.xlu0 %503, %v483
    %v505 = vpop.permute.xlu0 %504
    %506 = vset.pattern.permute.xlu0 7
    %507 = vperm.xlu0 %506, %v484
    %v508 = vpop.permute.xlu0 %507
    %vm509 = vcmp.eq.s32.totalorder %v35, %v487
    %vm510 = vcmp.eq.s32.totalorder %v36, %v487
    %vm511 = vcmp.eq.s32.totalorder %v35, %v490
    %vm512 = vcmp.eq.s32.totalorder %v36, %v490
    %vm513 = vcmp.eq.s32.totalorder %v35, %v493
    %vm514 = vcmp.eq.s32.totalorder %v36, %v493
    %vm515 = vcmp.eq.s32.totalorder %v35, %v496
    %vm516 = vcmp.eq.s32.totalorder %v36, %v496
    %vm517 = vcmp.eq.s32.totalorder %v35, %v499
    %vm518 = vcmp.eq.s32.totalorder %v36, %v499
    %vm519 = vcmp.eq.s32.totalorder %v35, %v502
    %vm520 = vcmp.eq.s32.totalorder %v36, %v502
    %vm521 = vcmp.eq.s32.totalorder %v35, %v505
    %vm522 = vcmp.eq.s32.totalorder %v36, %v505
    %vm523 = vcmp.eq.s32.totalorder %v35, %v508
    %vm524 = vcmp.eq.s32.totalorder %v36, %v508
    %vm525 = vmor %vm461, %vm509
    %vm526 = vmor %vm462, %vm510
    %vm527 = vmor %vm463, %vm511
    %vm528 = vmor %vm464, %vm512
    %vm529 = vmor %vm465, %vm513
    %vm530 = vmor %vm466, %vm514
    %vm531 = vmor %vm467, %vm515
    %vm532 = vmor %vm468, %vm516
    %vm533 = vmor %vm469, %vm517
    %vm534 = vmor %vm470, %vm518
    %vm535 = vmor %vm471, %vm519
    %vm536 = vmor %vm472, %vm520
    %vm537 = vmor %vm473, %vm521
    %vm538 = vmor %vm474, %vm522
    %vm539 = vmor %vm475, %vm523
    %vm540 = vmor %vm476, %vm524
    %vm541 = vmor %vm413, %vm525
    %vm542 = vmor %vm414, %vm526
    %vm543 = vmor %vm415, %vm527
    %vm544 = vmor %vm416, %vm528
    %vm545 = vmor %vm417, %vm529
    %vm546 = vmor %vm418, %vm530
    %vm547 = vmor %vm419, %vm531
    %vm548 = vmor %vm420, %vm532
    %vm549 = vmor %vm421, %vm533
    %vm550 = vmor %vm422, %vm534
    %vm551 = vmor %vm423, %vm535
    %vm552 = vmor %vm424, %vm536
    %vm553 = vmor %vm425, %vm537
    %vm554 = vmor %vm426, %vm538
    %vm555 = vmor %vm427, %vm539
    %vm556 = vmor %vm428, %vm540
    %v557 = vsel %vm541, 1, 0
    %v558 = vsel %vm542, 1, 0
    %v559 = vsel %vm543, 1, 0
    %v560 = vsel %vm544, 1, 0
    %v561 = vsel %vm545, 1, 0
    %v562 = vsel %vm546, 1, 0
    %v563 = vsel %vm547, 1, 0
    %v564 = vsel %vm548, 1, 0
    %v565 = vsel %vm549, 1, 0
    %v566 = vsel %vm550, 1, 0
    %v567 = vsel %vm551, 1, 0
    %v568 = vsel %vm552, 1, 0
    %v569 = vsel %vm553, 1, 0
    %v570 = vsel %vm554, 1, 0
    %v571 = vsel %vm555, 1, 0
    %v572 = vsel %vm556, 1, 0
    %v573 = vcvt.s32.f32 %v557
    %v574 = vcvt.s32.f32 %v558
    %v575 = vcvt.s32.f32 %v559
    %v576 = vcvt.s32.f32 %v560
    %v577 = vcvt.s32.f32 %v561
    %v578 = vcvt.s32.f32 %v562
    %v579 = vcvt.s32.f32 %v563
    %v580 = vcvt.s32.f32 %v564
    %v581 = vcvt.s32.f32 %v565
    %v582 = vcvt.s32.f32 %v566
    %v583 = vcvt.s32.f32 %v567
    %v584 = vcvt.s32.f32 %v568
    %v585 = vcvt.s32.f32 %v569
    %v586 = vcvt.s32.f32 %v570
    %v587 = vcvt.s32.f32 %v571
    %v588 = vcvt.s32.f32 %v572
    %v589 = vld [vmem:[#allocation2] sm:$0xff]
    %v590 = vld [vmem:[#allocation2 + $0x8] sm:$0xff]
    %v591 = vld [vmem:[#allocation2 + $0x10] sm:$0xff]
    %v592 = vld [vmem:[#allocation2 + $0x18] sm:$0xff]
    %v593 = vld [vmem:[#allocation2 + $0x20] sm:$0xff]
    %v594 = vld [vmem:[#allocation2 + $0x28] sm:$0xff]
    %v595 = vld [vmem:[#allocation2 + $0x30] sm:$0xff]
    %v596 = vld [vmem:[#allocation2 + $0x38] sm:$0xff]
    %v597 = vld [vmem:[#allocation2 + $0x40] sm:$0xff]
    %v598 = vld [vmem:[#allocation2 + $0x48] sm:$0xff]
    %v599 = vld [vmem:[#allocation2 + $0x50] sm:$0xff]
    %v600 = vld [vmem:[#allocation2 + $0x58] sm:$0xff]
    %v601 = vld [vmem:[#allocation2 + $0x60] sm:$0xff]
    %v602 = vld [vmem:[#allocation2 + $0x68] sm:$0xff]
    %v603 = vld [vmem:[#allocation2 + $0x70] sm:$0xff]
    %v604 = vld [vmem:[#allocation2 + $0x78] sm:$0xff]
    %v605 = vld [vmem:[#allocation2 + $0x80] sm:$0xff]
    %v606 = vld [vmem:[#allocation2 + $0x88] sm:$0xff]
    %v607 = vld [vmem:[#allocation2 + $0x90] sm:$0xff]
    %v608 = vld [vmem:[#allocation2 + $0x98] sm:$0xff]
    %v609 = vld [vmem:[#allocation2 + $0xa0] sm:$0xff]
    %v610 = vld [vmem:[#allocation2 + $0xa8] sm:$0xff]
    %v611 = vld [vmem:[#allocation2 + $0xb0] sm:$0xff]
    %v612 = vld [vmem:[#allocation2 + $0xb8] sm:$0xff]
    %vm613 = vcmask 523264
    %v615 = vsel %vm613, %v574, 0
    %v618 = vsel %vm613, %v576, 0
    %v621 = vsel %vm613, %v578, 0
    %v624 = vsel %vm613, %v580, 0
    %v627 = vsel %vm613, %v582, 0
    %v630 = vsel %vm613, %v584, 0
    %v633 = vsel %vm613, %v586, 0
    %v636 = vsel %vm613, %v588, 0
    %638 = vmatprep.subr.mxu0 0.0
    %639 = vmatpush1.msra.mxu0 %v589
    %640 = vmatprep.subr.mxu0 0.0
    %641 = vmatpush1.msra.mxu0 %v590
    %642 = vmatprep.subr.mxu0 0.0
    %643 = vmatpush1.msra.mxu0 %v591
    %644 = vmatprep.subr.mxu0 0.0
    %645 = vmatpush1.msra.mxu0 %v592
    %646 = vmatprep.subr.mxu0 0.0
    %647 = vmatpush1.msra.mxu0 %v593
    %648 = vmatprep.subr.mxu0 0.0
    %649 = vmatpush1.msra.mxu0 %v594
    %650 = vmatprep.subr.mxu0 0.0
    %651 = vmatpush1.msra.mxu0 %v595
    %652 = vmatprep.subr.mxu0 0.0
    %653 = vmatpush1.msra.mxu0 %v596
    %654 = vmatprep.subr.mxu0 0.0
    %655 = vmatpush1.msra.mxu0 %v597
    %656 = vmatprep.subr.mxu0 0.0
    %657 = vmatpush1.msra.mxu0 %v598
    %658 = vmatprep.subr.mxu0 0.0
    %659 = vmatpush1.msra.mxu0 %v599
    %660 = vmatprep.subr.mxu0 0.0
    %661 = vmatpush1.msra.mxu0 %v600
    %662 = vmatprep.subr.mxu0 0.0
    %663 = vmatpush1.msra.mxu0 %v601
    %664 = vmatprep.subr.mxu0 0.0
    %665 = vmatpush1.msra.mxu0 %v602
    %666 = vmatprep.subr.mxu0 0.0
    %667 = vmatpush1.msra.mxu0 %v603
    %668 = vmatprep.subr.mxu0 0.0
    %669 = vmatpush1.msra.mxu0 %v604
    %670 = vmatprep.subr.mxu0 0.0
    %671 = vmatpush1.msra.mxu0 %v605
    %672 = vmatprep.subr.mxu0 0.0
    %673 = vmatpush1.msra.mxu0 %v606
    %674 = vmatprep.subr.mxu0 0.0
    %675 = vmatpush1.msra.mxu0 %v607
    %676 = vmatprep.subr.mxu0 0.0
    %677 = vmatpush1.msra.mxu0 %v608
    %678 = vmatprep.subr.mxu0 0.0
    %679 = vmatpush1.msra.mxu0 %v609
    %680 = vmatprep.subr.mxu0 0.0
    %681 = vmatpush1.msra.mxu0 %v610
    %682 = vmatprep.subr.mxu0 0.0
    %683 = vmatpush1.msra.mxu0 %v611
    %684 = vmatprep.subr.mxu0 0.0
    %685 = vmatpush1.msra.mxu0 %v612
    %686 = vmatprep.subr.mxu0 0.0
    %687 = vmatpush1.msra.mxu0 0.0
    %688 = vmatprep.subr.mxu0 0.0
    %689 = vmatpush1.msra.mxu0 0.0
    %690 = vmatprep.subr.mxu0 0.0
    %691 = vmatpush1.msra.mxu0 0.0
    %692 = vmatprep.subr.mxu0 0.0
    %693 = vmatpush1.msra.mxu0 0.0
    %694 = vmatprep.subr.mxu0 0.0
    %695 = vmatpush1.msra.mxu0 0.0
    %696 = vmatprep.subr.mxu0 0.0
    %697 = vmatpush1.msra.mxu0 0.0
    %698 = vmatprep.subr.mxu0 0.0
    %699 = vmatpush1.msra.mxu0 0.0
    %700 = vmatprep.subr.mxu0 0.0
    %701 = vmatpush1.msra.mxu0 0.0
    %702 = vmatprep.mubr.f32.mxu0 %v615
    %703 = vmatmul.mubr.f32.gmra.mrb[0].mxu0 %v573
    %v704 = vpop.f32.mrb[0].mxu0
    %v705 = vadd.f32 0.0, %v704
    %v706 = vpop.f32.mrb[0].mxu0
    %707 = vmatprep.mubr.f32.mxu0 %v618
    %708 = vmatmul.mubr.f32.gmra.mrb[0].mxu0 %v575
    %v709 = vpop.f32.mrb[0].mxu0
    %v710 = vadd.f32 0.0, %v709
    %v711 = vpop.f32.mrb[0].mxu0
    %712 = vmatprep.mubr.f32.mxu0 %v621
    %713 = vmatmul.mubr.f32.gmra.mrb[0].mxu0 %v577
    %v714 = vpop.f32.mrb[0].mxu0
    %v715 = vadd.f32 0.0, %v714
    %v716 = vpop.f32.mrb[0].mxu0
    %717 = vmatprep.mubr.f32.mxu0 %v624
    %718 = vmatmul.mubr.f32.gmra.mrb[0].mxu0 %v579
    %v719 = vpop.f32.mrb[0].mxu0
    %v720 = vadd.f32 0.0, %v719
    %v721 = vpop.f32.mrb[0].mxu0
    %722 = vmatprep.mubr.f32.mxu0 %v627
    %723 = vmatmul.mubr.f32.gmra.mrb[0].mxu0 %v581
    %v724 = vpop.f32.mrb[0].mxu0
    %v725 = vadd.f32 0.0, %v724
    %v726 = vpop.f32.mrb[0].mxu0
    %727 = vmatprep.mubr.f32.mxu0 %v630
    %728 = vmatmul.mubr.f32.gmra.mrb[0].mxu0 %v583
    %v729 = vpop.f32.mrb[0].mxu0
    %v730 = vadd.f32 0.0, %v729
    %v731 = vpop.f32.mrb[0].mxu0
    %732 = vmatprep.mubr.f32.mxu0 %v633
    %733 = vmatmul.mubr.f32.gmra.mrb[0].mxu0 %v585
    %v734 = vpop.f32.mrb[0].mxu0
    %v735 = vadd.f32 0.0, %v734
    %v736 = vpop.f32.mrb[0].mxu0
    %737 = vmatprep.mubr.f32.mxu0 %v636
    %738 = vmatmul.mubr.f32.gmra.mrb[0].mxu0 %v587
    %v739 = vpop.f32.mrb[0].mxu0
    %v740 = vadd.f32 0.0, %v739
    %v741 = vpop.f32.mrb[0].mxu0
    %742 = vdwg.mxu0
    %743 = vst [vmem:[#allocation5] sm:$0xff] %v705
    %744 = vst [vmem:[#allocation5 + $0x8] sm:$0xff] %v710
    %745 = vst [vmem:[#allocation5 + $0x10] sm:$0xff] %v715
    %746 = vst [vmem:[#allocation5 + $0x18] sm:$0xff] %v720
    %747 = vst [vmem:[#allocation5 + $0x20] sm:$0xff] %v725
    %748 = vst [vmem:[#allocation5 + $0x28] sm:$0xff] %v730
    %749 = vst [vmem:[#allocation5 + $0x30] sm:$0xff] %v735
    %750 = vst [vmem:[#allocation5 + $0x38] sm:$0xff] %v740
    // Predicated region
    $region14: #{tpu_custom_call.1} parent=1 // pred_check
      _
    $region15: #{tpu_custom_call.1} parent=1 // pred_check_branch
      %752 = sbr.rel (0) target = $region17
    $region16: #{tpu_custom_call.1} parent=1 // pred_region
      %s754 = ssub.s32 1024, 1024
      %755 = vsyncadd [#allocation4], %s754
      %s756 = sshll.u32 [#allocation5], 4
      %s757 = int_to_ptr.vmem [resolvable:$true] %s756
      %762 = dma.vmem_to_hbm [thread:$0]  %s757, 1024, %s2, [#allocation4], 128, 128, 8
    $region17: #{tpu_custom_call.1} parent=1 // pred_fallthru
      _
    // Predicated region
    $region18: #{tpu_custom_call.1} parent=1 // pred_check
      _
    $region19: #{tpu_custom_call.1} parent=1 // pred_check_branch
      %764 = sbr.rel (0) target = $region21
    $region20: #{tpu_custom_call.1} parent=1 // pred_region
      %765 = dma.done [#allocation4], 1024
    $region21: #{tpu_custom_call.1} parent=1 // pred_fallthru
      _
    %766 = vsyncpa [#allocation3], 1
    %767 = vsyncpa [#allocation4], 1

</llo_original>
